<compile_context>
chip_gen: v6e
topology: v6e:2x2x1
jax: 0.10.0
libtpu: 0.0.40
codegen_flags: <defaults>
</compile_context>

<pallas_src>
import functools

import jax
import jax.numpy as jnp
from jax.experimental import pallas as pl
from jax.experimental.pallas import tpu as pltpu

NUM_NODE_FEATURES = 8   # grakn_dataset.num_node_features (synthetic choice)
HIDDEN = 16             # GCNConv(num_node_features, 16)
NUM_CLASSES = 3         # GCNConv(16, 3)

FPAD = 128              # lane-padded feature width (one vreg lane row)


def _round_up(x, m):
    return ((x + m - 1) // m) * m


def _pad2d(x, rows, cols, dtype):
    x = jnp.asarray(x, dtype)
    out = jnp.zeros((rows, cols), dtype)
    return out.at[: x.shape[0], : x.shape[1]].set(x)


def _device_tiling():
    """Per-generation (row_tile, scoped VMEM budget)."""
    kind = jax.devices()[0].device_kind.lower()
    if "v5" in kind or "v6" in kind:
        # 128 MiB VMEM parts: bigger row tiles amortize per-step overhead on
        # the HBM-bound aggregate (~85% of roofline at 512 vs ~63% at 256).
        return 512, 96 * 1024 * 1024
    # v7x (64 MiB physical VMEM) and anything unknown: stay conservative.
    return 256, 48 * 1024 * 1024


def _plan_tiles(n, row_tile):
    """Pick padded size n_p, row tile tm, reduction tile tk.

    Constraints: a block's last two dims must be (8, 128)-divisible or equal
    the full array dim; grid extents must divide exactly; the parallel row
    axis should have >= 2 steps so both v7x TensorCores get work.
    """
    if n <= row_tile:
        n_p = _round_up(n, 16)   # minimal padding (was unconditionally 256)
        tm = n_p // 2            # >= 2 row steps; multiple of 8 since n_p%16==0
        tk = n_p                 # single K step; full-dim block is legal
    else:
        n_p = _round_up(n, row_tile)
        tm = row_tile
        tk = row_tile            # multiple of 128 -> legal A_hat minor block
    return n_p, tm, tk


# ---------------------------------------------------------------------------
# Fused GCNConv kernel:  out = act(A_hat @ (X @ W) + b)
# ---------------------------------------------------------------------------
def gcn_layer_kernel(a_ref, x_ref, w_ref, b_ref, o_ref, acc_ref, *, apply_relu):
    """Per (row-tile i, K-tile k) grid step:

        acc[i] += A[i, k] @ (X[k] @ W)      (transform fused into aggregate)
        o[i]    = act(acc[i] + b)           (on the last K step)
    """
    k = pl.program_id(1)

    @pl.when(k == 0)
    def _init():
        acc_ref[...] = jnp.zeros_like(acc_ref)

    # Recompute the K-tile's X @ W on the fly; it is free under the
    # memory-bound roofline of the streamed A_hat matmul.
    xw = jnp.dot(x_ref[...], w_ref[...], preferred_element_type=jnp.float32)
    acc_ref[...] += jnp.dot(a_ref[...], xw, preferred_element_type=jnp.float32)

    @pl.when(k == pl.num_programs(1) - 1)
    def _finalize():
        out = acc_ref[...] + b_ref[...]
        if apply_relu:
            out = jnp.maximum(out, 0.0)
        o_ref[...] = out.astype(o_ref.dtype)


def _gcn_layer(a_p, x_p, w_p, b_p, tm, tk, vmem_limit, *, apply_relu):
    n_p = a_p.shape[0]
    fpad = w_p.shape[1]
    grid = (n_p // tm, n_p // tk)
    kernel = functools.partial(gcn_layer_kernel, apply_relu=apply_relu)

    flops = 2 * n_p * n_p * fpad + 2 * (n_p // tm) * n_p * fpad * fpad
    bytes_accessed = (
        n_p * n_p * 4                       # A_hat streamed once
        + (n_p // tm) * n_p * fpad * 4      # X re-streamed per row tile
        + fpad * fpad * 4 + fpad * 4        # resident W + bias
        + n_p * fpad * 4                    # output
    )

    return pl.pallas_call(
        kernel,
        out_shape=jax.ShapeDtypeStruct((n_p, fpad), jnp.float32),
        grid_spec=pltpu.PrefetchScalarGridSpec(
            num_scalar_prefetch=0,
            grid=grid,
            in_specs=[
                pl.BlockSpec((tm, tk), lambda i, k: (i, k)),      # A_hat tile (streamed)
                pl.BlockSpec((tk, fpad), lambda i, k: (k, 0)),    # X K-tile
                pl.BlockSpec((fpad, fpad), lambda i, k: (0, 0)),  # W (resident)
                pl.BlockSpec((1, fpad), lambda i, k: (0, 0)),     # bias (resident)
            ],
            out_specs=pl.BlockSpec((tm, fpad), lambda i, k: (i, 0)),
            scratch_shapes=[pltpu.VMEM((tm, fpad), jnp.float32)],
        ),
        compiler_params=pltpu.CompilerParams(
            dimension_semantics=("parallel", "arbitrary"),
            vmem_limit_bytes=vmem_limit,
        ),
        cost_estimate=pl.CostEstimate(
            flops=flops, transcendentals=0, bytes_accessed=bytes_accessed
        ),
    )(a_p, x_p, w_p, b_p)


def gcn_forward(a_hat, x, w1, b1, w2, b2):
    """Two GCNConv layers + ReLU, matching the PyTorch module's forward."""
    n = x.shape[0]
    row_tile, vmem_limit = _device_tiling()
    n_p, tm, tk = _plan_tiles(n, row_tile)

    # Pad to tile-aligned, lane-dense shapes; everything stays f32 (see header).
    a_p = _pad2d(a_hat, n_p, n_p, jnp.float32)
    x_p = _pad2d(x, n_p, FPAD, jnp.float32)
    w1_p = _pad2d(w1, FPAD, FPAD, jnp.float32)
    w2_p = _pad2d(w2, FPAD, FPAD, jnp.float32)
    b1_p = _pad2d(b1.reshape(1, -1), 1, FPAD, jnp.float32)
    b2_p = _pad2d(b2.reshape(1, -1), 1, FPAD, jnp.float32)

    # Layer 1: h1 = relu(A_hat @ (x @ W1) + b1)   (one fused kernel)
    h1 = _gcn_layer(a_p, x_p, w1_p, b1_p, tm, tk, vmem_limit, apply_relu=True)
    # Layer 2: out = A_hat @ (h1 @ W2) + b2       (one fused kernel)
    out = _gcn_layer(a_p, h1, w2_p, b2_p, tm, tk, vmem_limit, apply_relu=False)

    return out[:n, : w2.shape[1]]


def build_normalized_adjacency(edge_index, num_nodes):
    """PyG GCNConv gcn_norm: add self loops, deg from target, D^-1/2 A D^-1/2."""
    src = edge_index[0]
    dst = edge_index[1]
    loop = jnp.arange(num_nodes, dtype=edge_index.dtype)
    src = jnp.concatenate([src, loop])
    dst = jnp.concatenate([dst, loop])
    w = jnp.ones(src.shape[0], dtype=jnp.float32)
    deg = jnp.zeros((num_nodes,), jnp.float32).at[dst].add(w)
    dinv = jnp.where(deg > 0, 1.0 / jnp.sqrt(deg), 0.0)
    norm = dinv[src] * w * dinv[dst]
    a_hat = jnp.zeros((num_nodes, num_nodes), jnp.float32).at[dst, src].add(norm)
    return a_hat


if __name__ == "__main__":
    # TODO(synk): Grakn client/session/dataset loading has no Pallas equivalent;
    # a deterministic synthetic graph stands in for GraknPytorchGeometricDataSet.
    key = jax.random.PRNGKey(0)
    kx, kw1, kb1, kw2, kb2 = jax.random.split(key, 5)

    N = 16  # number of graph nodes
    x = jax.random.normal(kx, (N, NUM_NODE_FEATURES), jnp.float32)

    # Deterministic ring graph, edges in both directions: edge_index is [2, E]
    src = jnp.arange(N, dtype=jnp.int32)
    dst = (src + 1) % N
    edge_index = jnp.stack(
        [jnp.concatenate([src, dst]), jnp.concatenate([dst, src])], axis=0
    )

    # GCNConv params: weight [in, out] applied as x @ W, plus bias
    w1 = jax.random.normal(kw1, (NUM_NODE_FEATURES, HIDDEN), jnp.float32) * 0.1
    b1 = jax.random.normal(kb1, (1, HIDDEN), jnp.float32) * 0.1
    w2 = jax.random.normal(kw2, (HIDDEN, NUM_CLASSES), jnp.float32) * 0.1
    b2 = jax.random.normal(kb2, (1, NUM_CLASSES), jnp.float32) * 0.1

    a_hat = build_normalized_adjacency(edge_index, N)

    out = jax.jit(gcn_forward)(a_hat, x, w1, b1, w2, b2)
    jax.block_until_ready(out)
    assert out.shape == (N, NUM_CLASSES)

    # Pure-JAX f32 reference.
    h_ref = jnp.maximum(a_hat @ (x @ w1) + b1, 0.0)
    ref = a_hat @ (h_ref @ w2) + b2
    assert jnp.allclose(out, ref, atol=2e-2, rtol=2e-2), "mismatch vs reference"

    print("KERNEL_OK")
</pallas_src>

<mosaic_0001>
module attributes {stable_mosaic.version = 11 : i64} {
  func.func @gcn_layer_kernel(%arg0: i32, %arg1: i32, %arg2: memref<8x16xf32, #tpu.memory_space<vmem>>, %arg3: memref<16x128xf32, #tpu.memory_space<vmem>>, %arg4: memref<128x128xf32, #tpu.memory_space<vmem>>, %arg5: memref<1x128xf32, #tpu.memory_space<vmem>>, %arg6: memref<8x128xf32, #tpu.memory_space<vmem>>, %arg7: memref<8x128xf32, #tpu.memory_space<vmem>>) attributes {dimension_semantics = [#tpu.dimension_semantics<parallel>, #tpu.dimension_semantics<arbitrary>], iteration_bounds = array<i64: 2, 1>, scalar_prefetch = 0 : i64, scratch_operands = 1 : i64, tpu.core_type = #tpu.core_type<tc>, window_params = [{transform_indices = @transform_0, window_bounds = array<i64: 8, 16>}, {transform_indices = @transform_1, window_bounds = array<i64: 16, 128>}, {pipeline_mode = #tpu.pipeline_mode<synchronous>, transform_indices = @transform_2, window_bounds = array<i64: 128, 128>}, {pipeline_mode = #tpu.pipeline_mode<synchronous>, transform_indices = @transform_3, window_bounds = array<i64: 1, 128>}, {transform_indices = @transform_4, window_bounds = array<i64: 8, 128>}]} {
    %c0_i32 = arith.constant 0 : i32
    %0 = arith.cmpi eq, %arg1, %c0_i32 : i32
    %1 = arith.extui %0 : i1 to i32
    %c0_i32_0 = arith.constant 0 : i32
    %2 = arith.cmpi ne, %1, %c0_i32_0 : i32
    scf.if %2 {
      %cst_13 = arith.constant 0.000000e+00 : f32
      %14 = vector.broadcast %cst_13 : f32 to vector<8x128xf32>
      %c0_14 = arith.constant 0 : index
      %c0_15 = arith.constant 0 : index
      %15 = vector.load %arg7[%c0_14, %c0_15] : memref<8x128xf32, #tpu.memory_space<vmem>>, vector<8x128xf32>
      tpu.vector_store %arg7[%c0_14, %c0_15], %14 {strides = array<i32>} : memref<8x128xf32, #tpu.memory_space<vmem>>, vector<8x128xf32>,
    } else {
    }
    %c0 = arith.constant 0 : index
    %c0_1 = arith.constant 0 : index
    %3 = vector.load %arg3[%c0, %c0_1] : memref<16x128xf32, #tpu.memory_space<vmem>>, vector<16x128xf32>
    %c0_2 = arith.constant 0 : index
    %c0_3 = arith.constant 0 : index
    %4 = vector.load %arg4[%c0_2, %c0_3] : memref<128x128xf32, #tpu.memory_space<vmem>>, vector<128x128xf32>
    %cst = arith.constant dense<0.000000e+00> : vector<16x128xf32>
    %5 = tpu.matmul %3, %4, %cst {dimension_numbers = #tpu.dot_dimension_numbers<[1], [0], [0], [1], [0, 0, 1, 1], [], []>} : vector<16x128xf32>, vector<128x128xf32>, vector<16x128xf32> -> vector<16x128xf32>
    %c0_4 = arith.constant 0 : index
    %c0_5 = arith.constant 0 : index
    %6 = vector.load %arg7[%c0_4, %c0_5] : memref<8x128xf32, #tpu.memory_space<vmem>>, vector<8x128xf32>
    %c0_6 = arith.constant 0 : index
    %c0_7 = arith.constant 0 : index
    %7 = vector.load %arg2[%c0_6, %c0_7] : memref<8x16xf32, #tpu.memory_space<vmem>>, vector<8x16xf32>
    %cst_8 = arith.constant dense<0.000000e+00> : vector<8x128xf32>
    %8 = tpu.matmul %7, %5, %cst_8 {dimension_numbers = #tpu.dot_dimension_numbers<[1], [0], [0], [1], [0, 0, 1, 1], [], []>} : vector<8x16xf32>, vector<16x128xf32>, vector<8x128xf32> -> vector<8x128xf32>
    %9 = arith.addf %6, %8 : vector<8x128xf32>
    %c0_9 = arith.constant 0 : index
    %c0_10 = arith.constant 0 : index
    %10 = vector.load %arg7[%c0_9, %c0_10] : memref<8x128xf32, #tpu.memory_space<vmem>>, vector<8x128xf32>
    tpu.vector_store %arg7[%c0_9, %c0_10], %9 {strides = array<i32>} : memref<8x128xf32, #tpu.memory_space<vmem>>, vector<8x128xf32>,
    %c0_i32_11 = arith.constant 0 : i32
    %11 = arith.cmpi eq, %arg1, %c0_i32_11 : i32
    %12 = arith.extui %11 : i1 to i32
    %c0_i32_12 = arith.constant 0 : i32
    %13 = arith.cmpi ne, %12, %c0_i32_12 : i32
    scf.if %13 {
      %c0_13 = arith.constant 0 : index
      %c0_14 = arith.constant 0 : index
      %14 = vector.load %arg7[%c0_13, %c0_14] : memref<8x128xf32, #tpu.memory_space<vmem>>, vector<8x128xf32>
      %c0_15 = arith.constant 0 : index
      %c0_16 = arith.constant 0 : index
      %15 = vector.load %arg5[%c0_15, %c0_16] : memref<1x128xf32, #tpu.memory_space<vmem>>, vector<1x128xf32>
      %16 = vector.broadcast %15 : vector<1x128xf32> to vector<8x128xf32>
      %17 = arith.addf %14, %16 : vector<8x128xf32>
      %cst_17 = arith.constant 0.000000e+00 : f32
      %18 = vector.broadcast %cst_17 : f32 to vector<8x128xf32>
      %19 = arith.maximumf %17, %18 : vector<8x128xf32>
      %c0_18 = arith.constant 0 : index
      %c0_19 = arith.constant 0 : index
      %20 = vector.load %arg6[%c0_18, %c0_19] : memref<8x128xf32, #tpu.memory_space<vmem>>, vector<8x128xf32>
      tpu.vector_store %arg6[%c0_18, %c0_19], %19 {strides = array<i32>} : memref<8x128xf32, #tpu.memory_space<vmem>>, vector<8x128xf32>,
    } else {
    }
    return
  }
  func.func @transform_0(%arg0: i32, %arg1: i32) -> (i32, i32) {
    %c0_i32 = arith.constant 0 : i32
    return %arg0, %arg1 : i32, i32
  }
  func.func @transform_1(%arg0: i32, %arg1: i32) -> (i32, i32) {
    %c0_i32 = arith.constant 0 : i32
    %c0_i32_0 = arith.constant 0 : i32
    return %arg1, %c0_i32 : i32, i32
  }
  func.func @transform_2(%arg0: i32, %arg1: i32) -> (i32, i32) {
    %c0_i32 = arith.constant 0 : i32
    %c0_i32_0 = arith.constant 0 : i32
    %c0_i32_1 = arith.constant 0 : i32
    return %c0_i32, %c0_i32_0 : i32, i32
  }
  func.func @transform_3(%arg0: i32, %arg1: i32) -> (i32, i32) {
    %c0_i32 = arith.constant 0 : i32
    %c0_i32_0 = arith.constant 0 : i32
    %c0_i32_1 = arith.constant 0 : i32
    return %c0_i32, %c0_i32_0 : i32, i32
  }
  func.func @transform_4(%arg0: i32, %arg1: i32) -> (i32, i32) {
    %c0_i32 = arith.constant 0 : i32
    %c0_i32_0 = arith.constant 0 : i32
    return %arg0, %c0_i32 : i32, i32
  }
}

module attributes {stable_mosaic.version = 11 : i64} {
  func.func @gcn_layer_kernel(%arg0: i32, %arg1: i32, %arg2: memref<8x16xf32, #tpu.memory_space<vmem>>, %arg3: memref<16x128xf32, #tpu.memory_space<vmem>>, %arg4: memref<128x128xf32, #tpu.memory_space<vmem>>, %arg5: memref<1x128xf32, #tpu.memory_space<vmem>>, %arg6: memref<8x128xf32, #tpu.memory_space<vmem>>, %arg7: memref<8x128xf32, #tpu.memory_space<vmem>>) attributes {dimension_semantics = [#tpu.dimension_semantics<parallel>, #tpu.dimension_semantics<arbitrary>], iteration_bounds = array<i64: 2, 1>, scalar_prefetch = 0 : i64, scratch_operands = 1 : i64, tpu.core_type = #tpu.core_type<tc>, window_params = [{transform_indices = @transform_0, window_bounds = array<i64: 8, 16>}, {transform_indices = @transform_1, window_bounds = array<i64: 16, 128>}, {pipeline_mode = #tpu.pipeline_mode<synchronous>, transform_indices = @transform_2, window_bounds = array<i64: 128, 128>}, {pipeline_mode = #tpu.pipeline_mode<synchronous>, transform_indices = @transform_3, window_bounds = array<i64: 1, 128>}, {transform_indices = @transform_4, window_bounds = array<i64: 8, 128>}]} {
    %c0_i32 = arith.constant 0 : i32
    %0 = arith.cmpi eq, %arg1, %c0_i32 : i32
    %1 = arith.extui %0 : i1 to i32
    %c0_i32_0 = arith.constant 0 : i32
    %2 = arith.cmpi ne, %1, %c0_i32_0 : i32
    scf.if %2 {
      %cst_13 = arith.constant 0.000000e+00 : f32
      %14 = vector.broadcast %cst_13 : f32 to vector<8x128xf32>
      %c0_14 = arith.constant 0 : index
      %c0_15 = arith.constant 0 : index
      %15 = vector.load %arg7[%c0_14, %c0_15] : memref<8x128xf32, #tpu.memory_space<vmem>>, vector<8x128xf32>
      tpu.vector_store %arg7[%c0_14, %c0_15], %14 {strides = array<i32>} : memref<8x128xf32, #tpu.memory_space<vmem>>, vector<8x128xf32>,
    } else {
    }
    %c0 = arith.constant 0 : index
    %c0_1 = arith.constant 0 : index
    %3 = vector.load %arg3[%c0, %c0_1] : memref<16x128xf32, #tpu.memory_space<vmem>>, vector<16x128xf32>
    %c0_2 = arith.constant 0 : index
    %c0_3 = arith.constant 0 : index
    %4 = vector.load %arg4[%c0_2, %c0_3] : memref<128x128xf32, #tpu.memory_space<vmem>>, vector<128x128xf32>
    %cst = arith.constant dense<0.000000e+00> : vector<16x128xf32>
    %5 = tpu.matmul %3, %4, %cst {dimension_numbers = #tpu.dot_dimension_numbers<[1], [0], [0], [1], [0, 0, 1, 1], [], []>} : vector<16x128xf32>, vector<128x128xf32>, vector<16x128xf32> -> vector<16x128xf32>
    %c0_4 = arith.constant 0 : index
    %c0_5 = arith.constant 0 : index
    %6 = vector.load %arg7[%c0_4, %c0_5] : memref<8x128xf32, #tpu.memory_space<vmem>>, vector<8x128xf32>
    %c0_6 = arith.constant 0 : index
    %c0_7 = arith.constant 0 : index
    %7 = vector.load %arg2[%c0_6, %c0_7] : memref<8x16xf32, #tpu.memory_space<vmem>>, vector<8x16xf32>
    %cst_8 = arith.constant dense<0.000000e+00> : vector<8x128xf32>
    %8 = tpu.matmul %7, %5, %cst_8 {dimension_numbers = #tpu.dot_dimension_numbers<[1], [0], [0], [1], [0, 0, 1, 1], [], []>} : vector<8x16xf32>, vector<16x128xf32>, vector<8x128xf32> -> vector<8x128xf32>
    %9 = arith.addf %6, %8 : vector<8x128xf32>
    %c0_9 = arith.constant 0 : index
    %c0_10 = arith.constant 0 : index
    %10 = vector.load %arg7[%c0_9, %c0_10] : memref<8x128xf32, #tpu.memory_space<vmem>>, vector<8x128xf32>
    tpu.vector_store %arg7[%c0_9, %c0_10], %9 {strides = array<i32>} : memref<8x128xf32, #tpu.memory_space<vmem>>, vector<8x128xf32>,
    %c0_i32_11 = arith.constant 0 : i32
    %11 = arith.cmpi eq, %arg1, %c0_i32_11 : i32
    %12 = arith.extui %11 : i1 to i32
    %c0_i32_12 = arith.constant 0 : i32
    %13 = arith.cmpi ne, %12, %c0_i32_12 : i32
    scf.if %13 {
      %c0_13 = arith.constant 0 : index
      %c0_14 = arith.constant 0 : index
      %14 = vector.load %arg7[%c0_13, %c0_14] : memref<8x128xf32, #tpu.memory_space<vmem>>, vector<8x128xf32>
      %c0_15 = arith.constant 0 : index
      %c0_16 = arith.constant 0 : index
      %15 = vector.load %arg5[%c0_15, %c0_16] : memref<1x128xf32, #tpu.memory_space<vmem>>, vector<1x128xf32>
      %16 = vector.broadcast %15 : vector<1x128xf32> to vector<8x128xf32>
      %17 = arith.addf %14, %16 : vector<8x128xf32>
      %c0_17 = arith.constant 0 : index
      %c0_18 = arith.constant 0 : index
      %18 = vector.load %arg6[%c0_17, %c0_18] : memref<8x128xf32, #tpu.memory_space<vmem>>, vector<8x128xf32>
      tpu.vector_store %arg6[%c0_17, %c0_18], %17 {strides = array<i32>} : memref<8x128xf32, #tpu.memory_space<vmem>>, vector<8x128xf32>,
    } else {
    }
    return
  }
  func.func @transform_0(%arg0: i32, %arg1: i32) -> (i32, i32) {
    %c0_i32 = arith.constant 0 : i32
    return %arg0, %arg1 : i32, i32
  }
  func.func @transform_1(%arg0: i32, %arg1: i32) -> (i32, i32) {
    %c0_i32 = arith.constant 0 : i32
    %c0_i32_0 = arith.constant 0 : i32
    return %arg1, %c0_i32 : i32, i32
  }
  func.func @transform_2(%arg0: i32, %arg1: i32) -> (i32, i32) {
    %c0_i32 = arith.constant 0 : i32
    %c0_i32_0 = arith.constant 0 : i32
    %c0_i32_1 = arith.constant 0 : i32
    return %c0_i32, %c0_i32_0 : i32, i32
  }
  func.func @transform_3(%arg0: i32, %arg1: i32) -> (i32, i32) {
    %c0_i32 = arith.constant 0 : i32
    %c0_i32_0 = arith.constant 0 : i32
    %c0_i32_1 = arith.constant 0 : i32
    return %c0_i32, %c0_i32_0 : i32, i32
  }
  func.func @transform_4(%arg0: i32, %arg1: i32) -> (i32, i32) {
    %c0_i32 = arith.constant 0 : i32
    %c0_i32_0 = arith.constant 0 : i32
    return %arg0, %c0_i32 : i32, i32
  }
}

</mosaic_0001>

<llo_original>
// kernel: gcn_forward.2
$region0: #{gcn_forward.2}
  #allocation0 [shape = 'u32[]', space=smem, size = 0x4, offset = 0x4, fixed_abs, tag = 'smem constant byte address 0x4 - core index']
  #allocation1 [shape = 'u32[144,128]{1,0:T(1,128)}', space=vmem, size = 0x12000, scoped, tag = 'internal scratch']
  #allocation2 [shape = 'f32[8,128]{1,0:T(8,128)}', space=vmem, size = 0x1000, scoped, tag = 'scratch operand']
  %s0 = inlined_call_operand.vmem [shape: f32[16,16], index: 0, kind: input, shape index: {}]
  %s1 = inlined_call_operand.vmem [shape: f32[16,128], index: 1, kind: input, shape index: {}]
  %s2 = inlined_call_operand.vmem [shape: f32[128,128], index: 2, kind: input, shape index: {}]
  %s3 = inlined_call_operand.vmem [shape: f32[1,128], index: 3, kind: input, shape index: {}]
  %s4 = inlined_call_operand.vmem [shape: f32[16,128], index: 4, kind: output, shape index: {}]
  %s5 = sld [smem:[#allocation0]]
  $region57: #{gcn_forward.2} parent=0
    _
  %s7 = ssub.s32 1, %s5
  %s8 = scalar_select 0, %s7, %s5
  loop: start=0, step=1, limit=4
  $region2: #{gcn_forward.2} parent=0 // loop_pre_header
    _
  $region3: #{gcn_forward.2} parent=0 // loop_header
    %s10 = sphi 0, %s14
    %p11 = scmp.ge.s32.totalorder %s10, 4
    %s17 = sphi 0, %s29
    %s18 = sphi 0, %s25
    %s19 = sphi 0, %s17
    %s20 = sphi 0, %s18
    %s21 = sphi 0, %s19
    %s22 = sphi 0, %s20
    %s34 = sphi 0, %s36
    %s37 = sphi 0, %s34
    %s38 = sphi 0, %s37
    %s54 = sphi 0, %s38
    %s60 = sphi 0, %s62
    %s63 = sphi 0, %s60
    %s64 = sphi 0, %s63
    %s80 = sphi 0, %s64
    %s84 = sphi 0, %s84
    %s86 = sphi 0, %s84
    %s87 = sphi 0, %s86
    %s101 = sphi 0, %s87
    %s105 = sphi 0, %s105
    %s107 = sphi 0, %s105
    %s108 = sphi 0, %s107
    %s122 = sphi 0, %s108
    %s128 = sphi 0, %s130
    %s131 = sphi 0, %s128
    %s132 = sphi 0, %s131
    %s148 = sphi 0, %s132
  $region4: #{gcn_forward.2} parent=0 // loop_header_branch
    %13 = sbr.rel (%p11) target = $region8
  $region5: #{gcn_forward.2} parent=0 // loop_body
    %s15 = ssub.s32 %s10, 1
    %s16 = ssub.s32 %s10, 2
    %s23 = sadd.s32 1, %s18
    %p24 = scmp.ge.s32.totalorder %s23, 1
    %s25 = scalar_select %p24, 0, %s23
    %s26 = sadd.s32 1, %s17
    %s27 = scalar_select %p24, %s26, %s17
    %p28 = scmp.ge.s32.totalorder %s27, 2
    %s29 = scalar_select %p28, 0, %s27
    %s30 = ssub.s32 %s17, %s29
    %s31 = ssub.s32 %s18, %s25
    %s32 = sor.u32 %s30, %s31
    %p33 = scmp.eq.s32.totalorder %s32, 0
    %s35 = sadd.s32 %s34, 1
    %s36 = scalar_select %p33, %s34, %s35
    %p39 = pneg %p33
    %p40 = scmp.eq.s32.totalorder %s10, 1
    %p41 = por %p39, %p40
    %p42 = scmp.ne.s32.totalorder %s34, %s37
    %p43 = scmp.eq.s32.totalorder %s10, 0
    %p44 = por %p42, %p43
    %p45 = scmp.ne.s32.totalorder %s34, %s37
    %p46 = scmp.eq.s32.totalorder %s15, 1
    %p47 = por %p45, %p46
    %p48 = scmp.ne.s32.totalorder %s37, %s38
    %p49 = scmp.eq.s32.totalorder %s15, 0
    %p50 = por %p48, %p49
    %p51 = scmp.ne.s32.totalorder %s37, %s38
    %p52 = scmp.eq.s32.totalorder %s16, 1
    %p53 = por %p51, %p52
    %p55 = scmp.ne.s32.totalorder %s38, %s54
    %p56 = scmp.eq.s32.totalorder %s16, 0
    %p57 = por %p55, %p56
    %s58 = ssub.s32 %s18, %s25
    %p59 = scmp.eq.s32.totalorder %s58, 0
    %s61 = sadd.s32 %s60, 1
    %s62 = scalar_select %p59, %s60, %s61
    %p65 = pneg %p59
    %p66 = scmp.eq.s32.totalorder %s10, 1
    %p67 = por %p65, %p66
    %p68 = scmp.ne.s32.totalorder %s60, %s63
    %p69 = scmp.eq.s32.totalorder %s10, 0
    %p70 = por %p68, %p69
    %p71 = scmp.ne.s32.totalorder %s60, %s63
    %p72 = scmp.eq.s32.totalorder %s15, 1
    %p73 = por %p71, %p72
    %p74 = scmp.ne.s32.totalorder %s63, %s64
    %p75 = scmp.eq.s32.totalorder %s15, 0
    %p76 = por %p74, %p75
    %p77 = scmp.ne.s32.totalorder %s63, %s64
    %p78 = scmp.eq.s32.totalorder %s16, 1
    %p79 = por %p77, %p78
    %p81 = scmp.ne.s32.totalorder %s64, %s80
    %p82 = scmp.eq.s32.totalorder %s16, 0
    %p83 = por %p81, %p82
    %s85 = sadd.s32 %s84, 1
    %p88 = scmp.eq.s32.totalorder %s10, 1
    %p89 = scmp.ne.s32.totalorder %s84, %s86
    %p90 = scmp.eq.s32.totalorder %s10, 0
    %p91 = por %p89, %p90
    %p92 = scmp.ne.s32.totalorder %s84, %s86
    %p93 = scmp.eq.s32.totalorder %s15, 1
    %p94 = por %p92, %p93
    %p95 = scmp.ne.s32.totalorder %s86, %s87
    %p96 = scmp.eq.s32.totalorder %s15, 0
    %p97 = por %p95, %p96
    %p98 = scmp.ne.s32.totalorder %s86, %s87
    %p99 = scmp.eq.s32.totalorder %s16, 1
    %p100 = por %p98, %p99
    %p102 = scmp.ne.s32.totalorder %s87, %s101
    %p103 = scmp.eq.s32.totalorder %s16, 0
    %p104 = por %p102, %p103
    %s106 = sadd.s32 %s105, 1
    %p109 = scmp.eq.s32.totalorder %s10, 1
    %p110 = scmp.ne.s32.totalorder %s105, %s107
    %p111 = scmp.eq.s32.totalorder %s10, 0
    %p112 = por %p110, %p111
    %p113 = scmp.ne.s32.totalorder %s105, %s107
    %p114 = scmp.eq.s32.totalorder %s15, 1
    %p115 = por %p113, %p114
    %p116 = scmp.ne.s32.totalorder %s107, %s108
    %p117 = scmp.eq.s32.totalorder %s15, 0
    %p118 = por %p116, %p117
    %p119 = scmp.ne.s32.totalorder %s107, %s108
    %p120 = scmp.eq.s32.totalorder %s16, 1
    %p121 = por %p119, %p120
    %p123 = scmp.ne.s32.totalorder %s108, %s122
    %p124 = scmp.eq.s32.totalorder %s16, 0
    %p125 = por %p123, %p124
    %s126 = ssub.s32 %s17, %s29
    %p127 = scmp.eq.s32.totalorder %s126, 0
    %s129 = sadd.s32 %s128, 1
    %s130 = scalar_select %p127, %s128, %s129
    %p133 = pneg %p127
    %p134 = scmp.eq.s32.totalorder %s10, 1
    %p135 = por %p133, %p134
    %p136 = scmp.ne.s32.totalorder %s128, %s131
    %p137 = scmp.eq.s32.totalorder %s10, 0
    %p138 = por %p136, %p137
    %p139 = scmp.ne.s32.totalorder %s128, %s131
    %p140 = scmp.eq.s32.totalorder %s15, 1
    %p141 = por %p139, %p140
    %p142 = scmp.ne.s32.totalorder %s131, %s132
    %p143 = scmp.eq.s32.totalorder %s15, 0
    %p144 = por %p142, %p143
    %p145 = scmp.ne.s32.totalorder %s131, %s132
    %p146 = scmp.eq.s32.totalorder %s16, 1
    %p147 = por %p145, %p146
    %p149 = scmp.ne.s32.totalorder %s132, %s148
    %p150 = scmp.eq.s32.totalorder %s16, 0
    %p151 = por %p149, %p150
    %p152 = scmp.le.s32.totalorder 1, %s10
    %p153 = scmp.lt.s32.totalorder %s10, 3
    %p154 = pnand %p152, %p153
    %p155 = pneg %p154
    // Predicated region
    $region9: #{gcn_forward.2} parent=5 // pred_check
      _
    $region10: #{gcn_forward.2} parent=5 // pred_check_branch
      %157 = sbr.rel (%p154) target = $region12
    $region11: #{gcn_forward.2} parent=5 // pred_region
      %s158 = ssub.s32 %s10, 1
      // Predicated region
      $region13: #{gcn_forward.2} parent=11 // pred_check
        %p159 = pneg %p76
      $region14: #{gcn_forward.2} parent=11 // pred_check_branch
        %161 = sbr.rel (%p159) target = $region16
      $region15: #{gcn_forward.2} parent=11 // pred_region
        %s162 = smul.u32 2, %s20
        %p163 = scmp.lt.s32.totalorder %s162, 1
        %s164 = scalar_select %p163, %s162, 1
        %s165 = smul.addr %s164, 8
        %s166 = scalar_lea.vmem %s1, %s165
        %s167 = smul.u32 2, %s20
      $region16: #{gcn_forward.2} parent=11 // pred_fallthru
        _
      // Predicated region
      $region17: #{gcn_forward.2} parent=11 // pred_check
        %p168 = pneg %p97
      $region18: #{gcn_forward.2} parent=11 // pred_check_branch
        %170 = sbr.rel (%p168) target = $region20
      $region19: #{gcn_forward.2} parent=11 // pred_region
        _
      $region20: #{gcn_forward.2} parent=11 // pred_fallthru
        _
      // Predicated region
      $region21: #{gcn_forward.2} parent=11 // pred_check
        %p171 = pneg %p118
      $region22: #{gcn_forward.2} parent=11 // pred_check_branch
        %173 = sbr.rel (%p171) target = $region24
      $region23: #{gcn_forward.2} parent=11 // pred_region
        _
      $region24: #{gcn_forward.2} parent=11 // pred_fallthru
        _
    $region12: #{gcn_forward.2} parent=5 // pred_fallthru
      _
    %p174 = scmp.lt.s32.totalorder %s10, 2
    // Predicated region
    $region25: #{gcn_forward.2} parent=5 // pred_check
      %p175 = pneg %p174
    $region26: #{gcn_forward.2} parent=5 // pred_check_branch
      %177 = sbr.rel (%p175) target = $region28
    $region27: #{gcn_forward.2} parent=5 // pred_region
      // Predicated region
      $region29: #{gcn_forward.2} parent=27 // pred_check
        %p178 = pneg %p44
      $region30: #{gcn_forward.2} parent=27 // pred_check_branch
        %180 = sbr.rel (%p178) target = $region32
      $region31: #{gcn_forward.2} parent=27 // pred_region
        %p181 = scmp.lt.s32.totalorder %s17, 1
        %s182 = scalar_select %p181, %s17, 1
        %p183 = scmp.lt.s32.totalorder %s18, 0
        %s184 = scalar_select %p183, %s18, 0
        %s185 = sadd.s32 %s184, %s182
        %s186 = smul.addr %s185, 8
        %s187 = scalar_lea.vmem %s0, %s186
      $region32: #{gcn_forward.2} parent=27 // pred_fallthru
        _
    $region28: #{gcn_forward.2} parent=5 // pred_fallthru
      _
    %p188 = scmp.le.s32.totalorder 1, %s10
    %p189 = scmp.lt.s32.totalorder %s10, 3
    %p190 = pnand %p188, %p189
    %p191 = pneg %p190
    // Predicated region
    $region33: #{gcn_forward.2} parent=5 // pred_check
      _
    $region34: #{gcn_forward.2} parent=5 // pred_check_branch
      %193 = sbr.rel (%p190) target = $region36
    $region35: #{gcn_forward.2} parent=5 // pred_region
      %s194 = ssub.s32 %s10, 1
      %p195 = scmp.lt.s32.totalorder %s19, 1
      %s196 = scalar_select %p195, %s19, 1
      %p197 = scmp.lt.s32.totalorder %s20, 0
      %s198 = scalar_select %p197, %s20, 0
      %s199 = sadd.s32 %s198, %s196
      %s200 = smul.addr %s199, 8
      %s201 = scalar_lea.vmem %s0, %s200
      %p202 = pneg %p50
      %p203 = pneg %p47
      %s204 = smul.u32 2, %s20
      %p205 = scmp.lt.s32.totalorder %s204, 1
      %s206 = scalar_select %p205, %s204, 1
      %s207 = smul.addr %s206, 8
      %s208 = scalar_lea.vmem %s1, %s207
      %p209 = pneg %p76
      %p210 = pneg %p73
      %p211 = pneg %p97
      %p212 = pneg %p94
      %p213 = pneg %p118
      %p214 = pneg %p115
      %p215 = pneg %p144
      %p216 = pneg %p141
      %p217 = scmp.lt.s32.totalorder %s19, 1
      %s218 = scalar_select %p217, %s19, 1
      %s219 = smul.addr %s218, 8
      %s220 = scalar_lea.vmem %s4, %s219
      %p221 = scmp.lt.s32.totalorder %s19, 1
      %s222 = scalar_select %p221, %s19, 1
      %p223 = scmp.lt.s32.totalorder %s20, 0
      %s224 = scalar_select %p223, %s20, 0
      %s225 = sadd.s32 %s224, %s222
      %s226 = smul.addr %s225, 8
      %s227 = scalar_lea.vmem %s0, %s226
      %s228 = smul.u32 2, %s20
      %p229 = scmp.lt.s32.totalorder %s228, 1
      %s230 = scalar_select %p229, %s228, 1
      %s231 = smul.addr %s230, 8
      %s232 = scalar_lea.vmem %s1, %s231
      %s233 = smul.u32 2, %s20
      %p234 = scmp.lt.s32.totalorder %s19, 1
      %s235 = scalar_select %p234, %s19, 1
      %s236 = smul.addr %s235, 8
      %s237 = scalar_lea.vmem %s4, %s236
      %p238 = scmp.eq.s32.totalorder %s20, 0
      // Predicated region
      $region37: #{gcn_forward.2} parent=35 // pred_check
        %p239 = pneg %p238
      $region38: #{gcn_forward.2} parent=35 // pred_check_branch
        %241 = sbr.rel (%p239) target = $region40
      $region39: #{gcn_forward.2} parent=35 // pred_region
        %242 = vst [vmem:[#allocation2] sm:$0xff] 0.0
      $region40: #{gcn_forward.2} parent=35 // pred_fallthru
        _
      %v243 = vld [vmem:[%s232] sm:$0xff]
      %v244 = vld [vmem:[%s232 + $0x8] sm:$0xff]
      %v245 = vld [vmem:[%s2] sm:$0xff]
      %v246 = vld [vmem:[%s2 + $0x8] sm:$0xff]
      %v247 = vld [vmem:[%s2 + $0x10] sm:$0xff]
      %v248 = vld [vmem:[%s2 + $0x18] sm:$0xff]
      %v249 = vld [vmem:[%s2 + $0x20] sm:$0xff]
      %v250 = vld [vmem:[%s2 + $0x28] sm:$0xff]
      %v251 = vld [vmem:[%s2 + $0x30] sm:$0xff]
      %v252 = vld [vmem:[%s2 + $0x38] sm:$0xff]
      %v253 = vld [vmem:[%s2 + $0x40] sm:$0xff]
      %v254 = vld [vmem:[%s2 + $0x48] sm:$0xff]
      %v255 = vld [vmem:[%s2 + $0x50] sm:$0xff]
      %v256 = vld [vmem:[%s2 + $0x58] sm:$0xff]
      %v257 = vld [vmem:[%s2 + $0x60] sm:$0xff]
      %v258 = vld [vmem:[%s2 + $0x68] sm:$0xff]
      %v259 = vld [vmem:[%s2 + $0x70] sm:$0xff]
      %v260 = vld [vmem:[%s2 + $0x78] sm:$0xff]
      %261 = vmatprep.subr.mxu0 0.0
      %262 = vmatpush1.msra.mxu0 %v260
      %263 = vmatprep.subr.mxu0 0.0
      %264 = vmatpush1.msra.mxu0 %v259
      %265 = vmatprep.subr.mxu0 0.0
      %266 = vmatpush1.msra.mxu0 %v258
      %267 = vmatprep.subr.mxu0 0.0
      %268 = vmatpush1.msra.mxu0 %v257
      %269 = vmatprep.subr.mxu0 0.0
      %270 = vmatpush1.msra.mxu0 %v256
      %271 = vmatprep.subr.mxu0 0.0
      %272 = vmatpush1.msra.mxu0 %v255
      %273 = vmatprep.subr.mxu0 0.0
      %274 = vmatpush1.msra.mxu0 %v254
      %275 = vmatprep.subr.mxu0 0.0
      %276 = vmatpush1.msra.mxu0 %v253
      %277 = vmatprep.subr.mxu0 0.0
      %278 = vmatpush1.msra.mxu0 %v252
      %279 = vmatprep.subr.mxu0 0.0
      %280 = vmatpush1.msra.mxu0 %v251
      %281 = vmatprep.subr.mxu0 0.0
      %282 = vmatpush1.msra.mxu0 %v250
      %283 = vmatprep.subr.mxu0 0.0
      %284 = vmatpush1.msra.mxu0 %v249
      %285 = vmatprep.subr.mxu0 0.0
      %286 = vmatpush1.msra.mxu0 %v248
      %287 = vmatprep.subr.mxu0 0.0
      %288 = vmatpush1.msra.mxu0 %v247
      %289 = vmatprep.subr.mxu0 0.0
      %290 = vmatpush1.msra.mxu0 %v246
      %291 = vmatprep.subr.mxu0 0.0
      %292 = vmatpush1.msra.mxu0 %v245
      %293 = vmatprep.subr.mxu0 0.0
      %294 = vmatpush2.msra.mxu0 0.0
      %295 = vmatprep.subr.mxu0 0.0
      %296 = vmatpush2.msra.mxu0 0.0
      %297 = vmatprep.subr.mxu0 0.0
      %298 = vmatpush2.msra.mxu0 0.0
      %299 = vmatprep.subr.mxu0 0.0
      %300 = vmatpush2.msra.mxu0 0.0
      %301 = vmatprep.subr.mxu0 0.0
      %302 = vmatpush2.msra.mxu0 0.0
      %303 = vmatprep.subr.mxu0 0.0
      %304 = vmatpush2.msra.mxu0 0.0
      %305 = vmatprep.subr.mxu0 0.0
      %306 = vmatpush2.msra.mxu0 0.0
      %307 = vmatprep.subr.mxu0 0.0
      %308 = vmatpush2.msra.mxu0 0.0
      %309 = vmatprep.subr.mxu0 0.0
      %310 = vmatpush2.msra.mxu0 0.0
      %311 = vmatprep.subr.mxu0 0.0
      %312 = vmatpush2.msra.mxu0 0.0
      %313 = vmatprep.subr.mxu0 0.0
      %314 = vmatpush2.msra.mxu0 0.0
      %315 = vmatprep.subr.mxu0 0.0
      %316 = vmatpush2.msra.mxu0 0.0
      %317 = vmatprep.subr.mxu0 0.0
      %318 = vmatpush2.msra.mxu0 0.0
      %319 = vmatprep.subr.mxu0 0.0
      %320 = vmatpush2.msra.mxu0 0.0
      %321 = vmatprep.subr.mxu0 0.0
      %322 = vmatpush2.msra.mxu0 0.0
      %323 = vmatprep.subr.mxu0 0.0
      %324 = vmatpush2.msra.mxu0 0.0
      %325 = vmatprep.mubr.f32.mxu0 0.0
      %326 = vmatmul.mubr.f32.gmra.mxu0 %v243
      %v327 = vpop.f32.mrf.mxu0
      %v328 = vadd.f32 0.0, %v327
      %v329 = vpop.f32.mrf.mxu0
      %330 = vmatprep.mubr.f32.mxu0 0.0
      %331 = vmatmul.mubr.f32.gmra.mxu0 %v244
      %v332 = vpop.f32.mrf.mxu0
      %v333 = vadd.f32 0.0, %v332
      %v334 = vpop.f32.mrf.mxu0
      %335 = vdwg.mxu0
      %v336 = vld [vmem:[#allocation2] sm:$0xff]
      %v337 = vld [vmem:[%s227] sm:$0xff]
      %vm338 = vcmask 130048
      %v340 = vsel %vm338, %v337, 0
      %342 = vmatprep.subr.mxu0 0.0
      %343 = vmatpush1.msra.mxu0 0.0
      %344 = vmatprep.subr.mxu0 0.0
      %345 = vmatpush1.msra.mxu0 0.0
      %346 = vmatprep.subr.mxu0 0.0
      %347 = vmatpush1.msra.mxu0 0.0
      %348 = vmatprep.subr.mxu0 0.0
      %349 = vmatpush1.msra.mxu0 0.0
      %350 = vmatprep.subr.mxu0 0.0
      %351 = vmatpush1.msra.mxu0 0.0
      %352 = vmatprep.subr.mxu0 0.0
      %353 = vmatpush1.msra.mxu0 0.0
      %354 = vmatprep.subr.mxu0 0.0
      %355 = vmatpush1.msra.mxu0 0.0
      %356 = vmatprep.subr.mxu0 0.0
      %357 = vmatpush1.msra.mxu0 0.0
      %358 = vmatprep.subr.mxu0 0.0
      %359 = vmatpush1.msra.mxu0 0.0
      %360 = vmatprep.subr.mxu0 0.0
      %361 = vmatpush1.msra.mxu0 0.0
      %362 = vmatprep.subr.mxu0 0.0
      %363 = vmatpush1.msra.mxu0 0.0
      %364 = vmatprep.subr.mxu0 0.0
      %365 = vmatpush1.msra.mxu0 0.0
      %366 = vmatprep.subr.mxu0 0.0
      %367 = vmatpush1.msra.mxu0 0.0
      %368 = vmatprep.subr.mxu0 0.0
      %369 = vmatpush1.msra.mxu0 0.0
      %370 = vmatprep.subr.mxu0 0.0
      %371 = vmatpush1.msra.mxu0 %v333
      %372 = vmatprep.subr.mxu0 0.0
      %373 = vmatpush1.msra.mxu0 %v328
      %374 = vmatprep.subr.mxu0 0.0
      %375 = vmatpush2.msra.mxu0 0.0
      %376 = vmatprep.subr.mxu0 0.0
      %377 = vmatpush2.msra.mxu0 0.0
      %378 = vmatprep.subr.mxu0 0.0
      %379 = vmatpush2.msra.mxu0 0.0
      %380 = vmatprep.subr.mxu0 0.0
      %381 = vmatpush2.msra.mxu0 0.0
      %382 = vmatprep.subr.mxu0 0.0
      %383 = vmatpush2.msra.mxu0 0.0
      %384 = vmatprep.subr.mxu0 0.0
      %385 = vmatpush2.msra.mxu0 0.0
      %386 = vmatprep.subr.mxu0 0.0
      %387 = vmatpush2.msra.mxu0 0.0
      %388 = vmatprep.subr.mxu0 0.0
      %389 = vmatpush2.msra.mxu0 0.0
      %390 = vmatprep.subr.mxu0 0.0
      %391 = vmatpush2.msra.mxu0 0.0
      %392 = vmatprep.subr.mxu0 0.0
      %393 = vmatpush2.msra.mxu0 0.0
      %394 = vmatprep.subr.mxu0 0.0
      %395 = vmatpush2.msra.mxu0 0.0
      %396 = vmatprep.subr.mxu0 0.0
      %397 = vmatpush2.msra.mxu0 0.0
      %398 = vmatprep.subr.mxu0 0.0
      %399 = vmatpush2.msra.mxu0 0.0
      %400 = vmatprep.subr.mxu0 0.0
      %401 = vmatpush2.msra.mxu0 0.0
      %402 = vmatprep.subr.mxu0 0.0
      %403 = vmatpush2.msra.mxu0 0.0
      %404 = vmatprep.subr.mxu0 0.0
      %405 = vmatpush2.msra.mxu0 0.0
      %406 = vmatprep.mubr.f32.mxu0 0.0
      %407 = vmatmul.mubr.f32.gmra.mxu0 %v340
      %v408 = vpop.f32.mrf.mxu0
      %v409 = vadd.f32 0.0, %v408
      %v410 = vpop.f32.mrf.mxu0
      %411 = vdwg.mxu0
      %v412 = vadd.f32 %v336, %v409
      %413 = vst [vmem:[#allocation2] sm:$0xff] %v412
      // Predicated region
      $region41: #{gcn_forward.2} parent=35 // pred_check
        %p414 = pneg %p238
      $region42: #{gcn_forward.2} parent=35 // pred_check_branch
        %416 = sbr.rel (%p414) target = $region44
      $region43: #{gcn_forward.2} parent=35 // pred_region
        %v417 = vld [vmem:[#allocation2] sm:$0xff]
        %v418 = vld [vmem:[%s3] sm:$0x1]
        %v420 = vlaneseq
        %v421 = vshrl.u32 %v420, 7
        %v422 = vsub.s32 0, %v421
        %v423 = vrot.slane %v418, %v422
        %v425 = vadd.f32 %v417, %v423
        %v426 = vmax.f32 %v425, 0.0
        %427 = vst [vmem:[%s237] sm:$0xff] %v426
      $region44: #{gcn_forward.2} parent=35 // pred_fallthru
        _
      %p428 = scmp.lt.s32.totalorder %s19, 1
      %s429 = scalar_select %p428, %s19, 1
      %s430 = smul.addr %s429, 8
      %s431 = scalar_lea.vmem %s4, %s430
      // Predicated region
      $region45: #{gcn_forward.2} parent=35 // pred_check
        %p432 = pneg %p141
      $region46: #{gcn_forward.2} parent=35 // pred_check_branch
        %434 = sbr.rel (%p432) target = $region48
      $region47: #{gcn_forward.2} parent=35 // pred_region
        _
      $region48: #{gcn_forward.2} parent=35 // pred_fallthru
        _
    $region36: #{gcn_forward.2} parent=5 // pred_fallthru
      _
    %p435 = scmp.le.s32.totalorder 2, %s10
    // Predicated region
    $region49: #{gcn_forward.2} parent=5 // pred_check
      %p436 = pneg %p435
    $region50: #{gcn_forward.2} parent=5 // pred_check_branch
      %438 = sbr.rel (%p436) target = $region52
    $region51: #{gcn_forward.2} parent=5 // pred_region
      %s439 = ssub.s32 %s10, 2
      // Predicated region
      $region53: #{gcn_forward.2} parent=51 // pred_check
        %p440 = pneg %p147
      $region54: #{gcn_forward.2} parent=51 // pred_check_branch
        %442 = sbr.rel (%p440) target = $region56
      $region55: #{gcn_forward.2} parent=51 // pred_region
        %p443 = scmp.lt.s32.totalorder %s21, 1
        %s444 = scalar_select %p443, %s21, 1
        %s445 = smul.addr %s444, 8
        %s446 = scalar_lea.vmem %s4, %s445
      $region56: #{gcn_forward.2} parent=51 // pred_fallthru
        _
    $region52: #{gcn_forward.2} parent=5 // pred_fallthru
      _
  $region6: #{gcn_forward.2} parent=0 // loop_footer
    %s14 = sadd.s32 1, %s10
  $region7: #{gcn_forward.2} parent=0 // loop_footer_branch
    %9 = sbr.rel target = $region3
  $region8: #{gcn_forward.2} parent=0 // loop_exit
    _

// kernel: gcn_forward.3
$region0: #{gcn_forward.3}
  #allocation0 [shape = 'u32[]', space=smem, size = 0x4, offset = 0x4, fixed_abs, tag = 'smem constant byte address 0x4 - core index']
  #allocation1 [shape = 'u32[144,128]{1,0:T(1,128)}', space=vmem, size = 0x12000, scoped, tag = 'internal scratch']
  #allocation2 [shape = 'f32[8,128]{1,0:T(8,128)}', space=vmem, size = 0x1000, scoped, tag = 'scratch operand']
  %s0 = inlined_call_operand.vmem [shape: f32[16,16], index: 0, kind: input, shape index: {}]
  %s1 = inlined_call_operand.vmem [shape: f32[16,128], index: 1, kind: input, shape index: {}]
  %s2 = inlined_call_operand.vmem [shape: f32[128,128], index: 2, kind: input, shape index: {}]
  %s3 = inlined_call_operand.vmem [shape: f32[1,128], index: 3, kind: input, shape index: {}]
  %s4 = inlined_call_operand.vmem [shape: f32[16,128], index: 4, kind: output, shape index: {}]
  %s5 = sld [smem:[#allocation0]]
  $region57: #{gcn_forward.3} parent=0
    _
  %s7 = ssub.s32 1, %s5
  %s8 = scalar_select 0, %s7, %s5
  loop: start=0, step=1, limit=4
  $region2: #{gcn_forward.3} parent=0 // loop_pre_header
    _
  $region3: #{gcn_forward.3} parent=0 // loop_header
    %s10 = sphi 0, %s14
    %p11 = scmp.ge.s32.totalorder %s10, 4
    %s17 = sphi 0, %s29
    %s18 = sphi 0, %s25
    %s19 = sphi 0, %s17
    %s20 = sphi 0, %s18
    %s21 = sphi 0, %s19
    %s22 = sphi 0, %s20
    %s34 = sphi 0, %s36
    %s37 = sphi 0, %s34
    %s38 = sphi 0, %s37
    %s54 = sphi 0, %s38
    %s60 = sphi 0, %s62
    %s63 = sphi 0, %s60
    %s64 = sphi 0, %s63
    %s80 = sphi 0, %s64
    %s84 = sphi 0, %s84
    %s86 = sphi 0, %s84
    %s87 = sphi 0, %s86
    %s101 = sphi 0, %s87
    %s105 = sphi 0, %s105
    %s107 = sphi 0, %s105
    %s108 = sphi 0, %s107
    %s122 = sphi 0, %s108
    %s128 = sphi 0, %s130
    %s131 = sphi 0, %s128
    %s132 = sphi 0, %s131
    %s148 = sphi 0, %s132
  $region4: #{gcn_forward.3} parent=0 // loop_header_branch
    %13 = sbr.rel (%p11) target = $region8
  $region5: #{gcn_forward.3} parent=0 // loop_body
    %s15 = ssub.s32 %s10, 1
    %s16 = ssub.s32 %s10, 2
    %s23 = sadd.s32 1, %s18
    %p24 = scmp.ge.s32.totalorder %s23, 1
    %s25 = scalar_select %p24, 0, %s23
    %s26 = sadd.s32 1, %s17
    %s27 = scalar_select %p24, %s26, %s17
    %p28 = scmp.ge.s32.totalorder %s27, 2
    %s29 = scalar_select %p28, 0, %s27
    %s30 = ssub.s32 %s17, %s29
    %s31 = ssub.s32 %s18, %s25
    %s32 = sor.u32 %s30, %s31
    %p33 = scmp.eq.s32.totalorder %s32, 0
    %s35 = sadd.s32 %s34, 1
    %s36 = scalar_select %p33, %s34, %s35
    %p39 = pneg %p33
    %p40 = scmp.eq.s32.totalorder %s10, 1
    %p41 = por %p39, %p40
    %p42 = scmp.ne.s32.totalorder %s34, %s37
    %p43 = scmp.eq.s32.totalorder %s10, 0
    %p44 = por %p42, %p43
    %p45 = scmp.ne.s32.totalorder %s34, %s37
    %p46 = scmp.eq.s32.totalorder %s15, 1
    %p47 = por %p45, %p46
    %p48 = scmp.ne.s32.totalorder %s37, %s38
    %p49 = scmp.eq.s32.totalorder %s15, 0
    %p50 = por %p48, %p49
    %p51 = scmp.ne.s32.totalorder %s37, %s38
    %p52 = scmp.eq.s32.totalorder %s16, 1
    %p53 = por %p51, %p52
    %p55 = scmp.ne.s32.totalorder %s38, %s54
    %p56 = scmp.eq.s32.totalorder %s16, 0
    %p57 = por %p55, %p56
    %s58 = ssub.s32 %s18, %s25
    %p59 = scmp.eq.s32.totalorder %s58, 0
    %s61 = sadd.s32 %s60, 1
    %s62 = scalar_select %p59, %s60, %s61
    %p65 = pneg %p59
    %p66 = scmp.eq.s32.totalorder %s10, 1
    %p67 = por %p65, %p66
    %p68 = scmp.ne.s32.totalorder %s60, %s63
    %p69 = scmp.eq.s32.totalorder %s10, 0
    %p70 = por %p68, %p69
    %p71 = scmp.ne.s32.totalorder %s60, %s63
    %p72 = scmp.eq.s32.totalorder %s15, 1
    %p73 = por %p71, %p72
    %p74 = scmp.ne.s32.totalorder %s63, %s64
    %p75 = scmp.eq.s32.totalorder %s15, 0
    %p76 = por %p74, %p75
    %p77 = scmp.ne.s32.totalorder %s63, %s64
    %p78 = scmp.eq.s32.totalorder %s16, 1
    %p79 = por %p77, %p78
    %p81 = scmp.ne.s32.totalorder %s64, %s80
    %p82 = scmp.eq.s32.totalorder %s16, 0
    %p83 = por %p81, %p82
    %s85 = sadd.s32 %s84, 1
    %p88 = scmp.eq.s32.totalorder %s10, 1
    %p89 = scmp.ne.s32.totalorder %s84, %s86
    %p90 = scmp.eq.s32.totalorder %s10, 0
    %p91 = por %p89, %p90
    %p92 = scmp.ne.s32.totalorder %s84, %s86
    %p93 = scmp.eq.s32.totalorder %s15, 1
    %p94 = por %p92, %p93
    %p95 = scmp.ne.s32.totalorder %s86, %s87
    %p96 = scmp.eq.s32.totalorder %s15, 0
    %p97 = por %p95, %p96
    %p98 = scmp.ne.s32.totalorder %s86, %s87
    %p99 = scmp.eq.s32.totalorder %s16, 1
    %p100 = por %p98, %p99
    %p102 = scmp.ne.s32.totalorder %s87, %s101
    %p103 = scmp.eq.s32.totalorder %s16, 0
    %p104 = por %p102, %p103
    %s106 = sadd.s32 %s105, 1
    %p109 = scmp.eq.s32.totalorder %s10, 1
    %p110 = scmp.ne.s32.totalorder %s105, %s107
    %p111 = scmp.eq.s32.totalorder %s10, 0
    %p112 = por %p110, %p111
    %p113 = scmp.ne.s32.totalorder %s105, %s107
    %p114 = scmp.eq.s32.totalorder %s15, 1
    %p115 = por %p113, %p114
    %p116 = scmp.ne.s32.totalorder %s107, %s108
    %p117 = scmp.eq.s32.totalorder %s15, 0
    %p118 = por %p116, %p117
    %p119 = scmp.ne.s32.totalorder %s107, %s108
    %p120 = scmp.eq.s32.totalorder %s16, 1
    %p121 = por %p119, %p120
    %p123 = scmp.ne.s32.totalorder %s108, %s122
    %p124 = scmp.eq.s32.totalorder %s16, 0
    %p125 = por %p123, %p124
    %s126 = ssub.s32 %s17, %s29
    %p127 = scmp.eq.s32.totalorder %s126, 0
    %s129 = sadd.s32 %s128, 1
    %s130 = scalar_select %p127, %s128, %s129
    %p133 = pneg %p127
    %p134 = scmp.eq.s32.totalorder %s10, 1
    %p135 = por %p133, %p134
    %p136 = scmp.ne.s32.totalorder %s128, %s131
    %p137 = scmp.eq.s32.totalorder %s10, 0
    %p138 = por %p136, %p137
    %p139 = scmp.ne.s32.totalorder %s128, %s131
    %p140 = scmp.eq.s32.totalorder %s15, 1
    %p141 = por %p139, %p140
    %p142 = scmp.ne.s32.totalorder %s131, %s132
    %p143 = scmp.eq.s32.totalorder %s15, 0
    %p144 = por %p142, %p143
    %p145 = scmp.ne.s32.totalorder %s131, %s132
    %p146 = scmp.eq.s32.totalorder %s16, 1
    %p147 = por %p145, %p146
    %p149 = scmp.ne.s32.totalorder %s132, %s148
    %p150 = scmp.eq.s32.totalorder %s16, 0
    %p151 = por %p149, %p150
    %p152 = scmp.le.s32.totalorder 1, %s10
    %p153 = scmp.lt.s32.totalorder %s10, 3
    %p154 = pnand %p152, %p153
    %p155 = pneg %p154
    // Predicated region
    $region9: #{gcn_forward.3} parent=5 // pred_check
      _
    $region10: #{gcn_forward.3} parent=5 // pred_check_branch
      %157 = sbr.rel (%p154) target = $region12
    $region11: #{gcn_forward.3} parent=5 // pred_region
      %s158 = ssub.s32 %s10, 1
      // Predicated region
      $region13: #{gcn_forward.3} parent=11 // pred_check
        %p159 = pneg %p76
      $region14: #{gcn_forward.3} parent=11 // pred_check_branch
        %161 = sbr.rel (%p159) target = $region16
      $region15: #{gcn_forward.3} parent=11 // pred_region
        %s162 = smul.u32 2, %s20
        %p163 = scmp.lt.s32.totalorder %s162, 1
        %s164 = scalar_select %p163, %s162, 1
        %s165 = smul.addr %s164, 8
        %s166 = scalar_lea.vmem %s1, %s165
        %s167 = smul.u32 2, %s20
      $region16: #{gcn_forward.3} parent=11 // pred_fallthru
        _
      // Predicated region
      $region17: #{gcn_forward.3} parent=11 // pred_check
        %p168 = pneg %p97
      $region18: #{gcn_forward.3} parent=11 // pred_check_branch
        %170 = sbr.rel (%p168) target = $region20
      $region19: #{gcn_forward.3} parent=11 // pred_region
        _
      $region20: #{gcn_forward.3} parent=11 // pred_fallthru
        _
      // Predicated region
      $region21: #{gcn_forward.3} parent=11 // pred_check
        %p171 = pneg %p118
      $region22: #{gcn_forward.3} parent=11 // pred_check_branch
        %173 = sbr.rel (%p171) target = $region24
      $region23: #{gcn_forward.3} parent=11 // pred_region
        _
      $region24: #{gcn_forward.3} parent=11 // pred_fallthru
        _
    $region12: #{gcn_forward.3} parent=5 // pred_fallthru
      _
    %p174 = scmp.lt.s32.totalorder %s10, 2
    // Predicated region
    $region25: #{gcn_forward.3} parent=5 // pred_check
      %p175 = pneg %p174
    $region26: #{gcn_forward.3} parent=5 // pred_check_branch
      %177 = sbr.rel (%p175) target = $region28
    $region27: #{gcn_forward.3} parent=5 // pred_region
      // Predicated region
      $region29: #{gcn_forward.3} parent=27 // pred_check
        %p178 = pneg %p44
      $region30: #{gcn_forward.3} parent=27 // pred_check_branch
        %180 = sbr.rel (%p178) target = $region32
      $region31: #{gcn_forward.3} parent=27 // pred_region
        %p181 = scmp.lt.s32.totalorder %s17, 1
        %s182 = scalar_select %p181, %s17, 1
        %p183 = scmp.lt.s32.totalorder %s18, 0
        %s184 = scalar_select %p183, %s18, 0
        %s185 = sadd.s32 %s184, %s182
        %s186 = smul.addr %s185, 8
        %s187 = scalar_lea.vmem %s0, %s186
      $region32: #{gcn_forward.3} parent=27 // pred_fallthru
        _
    $region28: #{gcn_forward.3} parent=5 // pred_fallthru
      _
    %p188 = scmp.le.s32.totalorder 1, %s10
    %p189 = scmp.lt.s32.totalorder %s10, 3
    %p190 = pnand %p188, %p189
    %p191 = pneg %p190
    // Predicated region
    $region33: #{gcn_forward.3} parent=5 // pred_check
      _
    $region34: #{gcn_forward.3} parent=5 // pred_check_branch
      %193 = sbr.rel (%p190) target = $region36
    $region35: #{gcn_forward.3} parent=5 // pred_region
      %s194 = ssub.s32 %s10, 1
      %p195 = scmp.lt.s32.totalorder %s19, 1
      %s196 = scalar_select %p195, %s19, 1
      %p197 = scmp.lt.s32.totalorder %s20, 0
      %s198 = scalar_select %p197, %s20, 0
      %s199 = sadd.s32 %s198, %s196
      %s200 = smul.addr %s199, 8
      %s201 = scalar_lea.vmem %s0, %s200
      %p202 = pneg %p50
      %p203 = pneg %p47
      %s204 = smul.u32 2, %s20
      %p205 = scmp.lt.s32.totalorder %s204, 1
      %s206 = scalar_select %p205, %s204, 1
      %s207 = smul.addr %s206, 8
      %s208 = scalar_lea.vmem %s1, %s207
      %p209 = pneg %p76
      %p210 = pneg %p73
      %p211 = pneg %p97
      %p212 = pneg %p94
      %p213 = pneg %p118
      %p214 = pneg %p115
      %p215 = pneg %p144
      %p216 = pneg %p141
      %p217 = scmp.lt.s32.totalorder %s19, 1
      %s218 = scalar_select %p217, %s19, 1
      %s219 = smul.addr %s218, 8
      %s220 = scalar_lea.vmem %s4, %s219
      %p221 = scmp.lt.s32.totalorder %s19, 1
      %s222 = scalar_select %p221, %s19, 1
      %p223 = scmp.lt.s32.totalorder %s20, 0
      %s224 = scalar_select %p223, %s20, 0
      %s225 = sadd.s32 %s224, %s222
      %s226 = smul.addr %s225, 8
      %s227 = scalar_lea.vmem %s0, %s226
      %s228 = smul.u32 2, %s20
      %p229 = scmp.lt.s32.totalorder %s228, 1
      %s230 = scalar_select %p229, %s228, 1
      %s231 = smul.addr %s230, 8
      %s232 = scalar_lea.vmem %s1, %s231
      %s233 = smul.u32 2, %s20
      %p234 = scmp.lt.s32.totalorder %s19, 1
      %s235 = scalar_select %p234, %s19, 1
      %s236 = smul.addr %s235, 8
      %s237 = scalar_lea.vmem %s4, %s236
      %p238 = scmp.eq.s32.totalorder %s20, 0
      // Predicated region
      $region37: #{gcn_forward.3} parent=35 // pred_check
        %p239 = pneg %p238
      $region38: #{gcn_forward.3} parent=35 // pred_check_branch
        %241 = sbr.rel (%p239) target = $region40
      $region39: #{gcn_forward.3} parent=35 // pred_region
        %242 = vst [vmem:[#allocation2] sm:$0xff] 0.0
      $region40: #{gcn_forward.3} parent=35 // pred_fallthru
        _
      %v243 = vld [vmem:[%s232] sm:$0xff]
      %v244 = vld [vmem:[%s232 + $0x8] sm:$0xff]
      %v245 = vld [vmem:[%s2] sm:$0xff]
      %v246 = vld [vmem:[%s2 + $0x8] sm:$0xff]
      %v247 = vld [vmem:[%s2 + $0x10] sm:$0xff]
      %v248 = vld [vmem:[%s2 + $0x18] sm:$0xff]
      %v249 = vld [vmem:[%s2 + $0x20] sm:$0xff]
      %v250 = vld [vmem:[%s2 + $0x28] sm:$0xff]
      %v251 = vld [vmem:[%s2 + $0x30] sm:$0xff]
      %v252 = vld [vmem:[%s2 + $0x38] sm:$0xff]
      %v253 = vld [vmem:[%s2 + $0x40] sm:$0xff]
      %v254 = vld [vmem:[%s2 + $0x48] sm:$0xff]
      %v255 = vld [vmem:[%s2 + $0x50] sm:$0xff]
      %v256 = vld [vmem:[%s2 + $0x58] sm:$0xff]
      %v257 = vld [vmem:[%s2 + $0x60] sm:$0xff]
      %v258 = vld [vmem:[%s2 + $0x68] sm:$0xff]
      %v259 = vld [vmem:[%s2 + $0x70] sm:$0xff]
      %v260 = vld [vmem:[%s2 + $0x78] sm:$0xff]
      %261 = vmatprep.subr.mxu0 0.0
      %262 = vmatpush1.msra.mxu0 %v260
      %263 = vmatprep.subr.mxu0 0.0
      %264 = vmatpush1.msra.mxu0 %v259
      %265 = vmatprep.subr.mxu0 0.0
      %266 = vmatpush1.msra.mxu0 %v258
      %267 = vmatprep.subr.mxu0 0.0
      %268 = vmatpush1.msra.mxu0 %v257
      %269 = vmatprep.subr.mxu0 0.0
      %270 = vmatpush1.msra.mxu0 %v256
      %271 = vmatprep.subr.mxu0 0.0
      %272 = vmatpush1.msra.mxu0 %v255
      %273 = vmatprep.subr.mxu0 0.0
      %274 = vmatpush1.msra.mxu0 %v254
      %275 = vmatprep.subr.mxu0 0.0
      %276 = vmatpush1.msra.mxu0 %v253
      %277 = vmatprep.subr.mxu0 0.0
      %278 = vmatpush1.msra.mxu0 %v252
      %279 = vmatprep.subr.mxu0 0.0
      %280 = vmatpush1.msra.mxu0 %v251
      %281 = vmatprep.subr.mxu0 0.0
      %282 = vmatpush1.msra.mxu0 %v250
      %283 = vmatprep.subr.mxu0 0.0
      %284 = vmatpush1.msra.mxu0 %v249
      %285 = vmatprep.subr.mxu0 0.0
      %286 = vmatpush1.msra.mxu0 %v248
      %287 = vmatprep.subr.mxu0 0.0
      %288 = vmatpush1.msra.mxu0 %v247
      %289 = vmatprep.subr.mxu0 0.0
      %290 = vmatpush1.msra.mxu0 %v246
      %291 = vmatprep.subr.mxu0 0.0
      %292 = vmatpush1.msra.mxu0 %v245
      %293 = vmatprep.subr.mxu0 0.0
      %294 = vmatpush2.msra.mxu0 0.0
      %295 = vmatprep.subr.mxu0 0.0
      %296 = vmatpush2.msra.mxu0 0.0
      %297 = vmatprep.subr.mxu0 0.0
      %298 = vmatpush2.msra.mxu0 0.0
      %299 = vmatprep.subr.mxu0 0.0
      %300 = vmatpush2.msra.mxu0 0.0
      %301 = vmatprep.subr.mxu0 0.0
      %302 = vmatpush2.msra.mxu0 0.0
      %303 = vmatprep.subr.mxu0 0.0
      %304 = vmatpush2.msra.mxu0 0.0
      %305 = vmatprep.subr.mxu0 0.0
      %306 = vmatpush2.msra.mxu0 0.0
      %307 = vmatprep.subr.mxu0 0.0
      %308 = vmatpush2.msra.mxu0 0.0
      %309 = vmatprep.subr.mxu0 0.0
      %310 = vmatpush2.msra.mxu0 0.0
      %311 = vmatprep.subr.mxu0 0.0
      %312 = vmatpush2.msra.mxu0 0.0
      %313 = vmatprep.subr.mxu0 0.0
      %314 = vmatpush2.msra.mxu0 0.0
      %315 = vmatprep.subr.mxu0 0.0
      %316 = vmatpush2.msra.mxu0 0.0
      %317 = vmatprep.subr.mxu0 0.0
      %318 = vmatpush2.msra.mxu0 0.0
      %319 = vmatprep.subr.mxu0 0.0
      %320 = vmatpush2.msra.mxu0 0.0
      %321 = vmatprep.subr.mxu0 0.0
      %322 = vmatpush2.msra.mxu0 0.0
      %323 = vmatprep.subr.mxu0 0.0
      %324 = vmatpush2.msra.mxu0 0.0
      %325 = vmatprep.mubr.f32.mxu0 0.0
      %326 = vmatmul.mubr.f32.gmra.mxu0 %v243
      %v327 = vpop.f32.mrf.mxu0
      %v328 = vadd.f32 0.0, %v327
      %v329 = vpop.f32.mrf.mxu0
      %330 = vmatprep.mubr.f32.mxu0 0.0
      %331 = vmatmul.mubr.f32.gmra.mxu0 %v244
      %v332 = vpop.f32.mrf.mxu0
      %v333 = vadd.f32 0.0, %v332
      %v334 = vpop.f32.mrf.mxu0
      %335 = vdwg.mxu0
      %v336 = vld [vmem:[#allocation2] sm:$0xff]
      %v337 = vld [vmem:[%s227] sm:$0xff]
      %vm338 = vcmask 130048
      %v340 = vsel %vm338, %v337, 0
      %342 = vmatprep.subr.mxu0 0.0
      %343 = vmatpush1.msra.mxu0 0.0
      %344 = vmatprep.subr.mxu0 0.0
      %345 = vmatpush1.msra.mxu0 0.0
      %346 = vmatprep.subr.mxu0 0.0
      %347 = vmatpush1.msra.mxu0 0.0
      %348 = vmatprep.subr.mxu0 0.0
      %349 = vmatpush1.msra.mxu0 0.0
      %350 = vmatprep.subr.mxu0 0.0
      %351 = vmatpush1.msra.mxu0 0.0
      %352 = vmatprep.subr.mxu0 0.0
      %353 = vmatpush1.msra.mxu0 0.0
      %354 = vmatprep.subr.mxu0 0.0
      %355 = vmatpush1.msra.mxu0 0.0
      %356 = vmatprep.subr.mxu0 0.0
      %357 = vmatpush1.msra.mxu0 0.0
      %358 = vmatprep.subr.mxu0 0.0
      %359 = vmatpush1.msra.mxu0 0.0
      %360 = vmatprep.subr.mxu0 0.0
      %361 = vmatpush1.msra.mxu0 0.0
      %362 = vmatprep.subr.mxu0 0.0
      %363 = vmatpush1.msra.mxu0 0.0
      %364 = vmatprep.subr.mxu0 0.0
      %365 = vmatpush1.msra.mxu0 0.0
      %366 = vmatprep.subr.mxu0 0.0
      %367 = vmatpush1.msra.mxu0 0.0
      %368 = vmatprep.subr.mxu0 0.0
      %369 = vmatpush1.msra.mxu0 0.0
      %370 = vmatprep.subr.mxu0 0.0
      %371 = vmatpush1.msra.mxu0 %v333
      %372 = vmatprep.subr.mxu0 0.0
      %373 = vmatpush1.msra.mxu0 %v328
      %374 = vmatprep.subr.mxu0 0.0
      %375 = vmatpush2.msra.mxu0 0.0
      %376 = vmatprep.subr.mxu0 0.0
      %377 = vmatpush2.msra.mxu0 0.0
      %378 = vmatprep.subr.mxu0 0.0
      %379 = vmatpush2.msra.mxu0 0.0
      %380 = vmatprep.subr.mxu0 0.0
      %381 = vmatpush2.msra.mxu0 0.0
      %382 = vmatprep.subr.mxu0 0.0
      %383 = vmatpush2.msra.mxu0 0.0
      %384 = vmatprep.subr.mxu0 0.0
      %385 = vmatpush2.msra.mxu0 0.0
      %386 = vmatprep.subr.mxu0 0.0
      %387 = vmatpush2.msra.mxu0 0.0
      %388 = vmatprep.subr.mxu0 0.0
      %389 = vmatpush2.msra.mxu0 0.0
      %390 = vmatprep.subr.mxu0 0.0
      %391 = vmatpush2.msra.mxu0 0.0
      %392 = vmatprep.subr.mxu0 0.0
      %393 = vmatpush2.msra.mxu0 0.0
      %394 = vmatprep.subr.mxu0 0.0
      %395 = vmatpush2.msra.mxu0 0.0
      %396 = vmatprep.subr.mxu0 0.0
      %397 = vmatpush2.msra.mxu0 0.0
      %398 = vmatprep.subr.mxu0 0.0
      %399 = vmatpush2.msra.mxu0 0.0
      %400 = vmatprep.subr.mxu0 0.0
      %401 = vmatpush2.msra.mxu0 0.0
      %402 = vmatprep.subr.mxu0 0.0
      %403 = vmatpush2.msra.mxu0 0.0
      %404 = vmatprep.subr.mxu0 0.0
      %405 = vmatpush2.msra.mxu0 0.0
      %406 = vmatprep.mubr.f32.mxu0 0.0
      %407 = vmatmul.mubr.f32.gmra.mxu0 %v340
      %v408 = vpop.f32.mrf.mxu0
      %v409 = vadd.f32 0.0, %v408
      %v410 = vpop.f32.mrf.mxu0
      %411 = vdwg.mxu0
      %v412 = vadd.f32 %v336, %v409
      %413 = vst [vmem:[#allocation2] sm:$0xff] %v412
      // Predicated region
      $region41: #{gcn_forward.3} parent=35 // pred_check
        %p414 = pneg %p238
      $region42: #{gcn_forward.3} parent=35 // pred_check_branch
        %416 = sbr.rel (%p414) target = $region44
      $region43: #{gcn_forward.3} parent=35 // pred_region
        %v417 = vld [vmem:[#allocation2] sm:$0xff]
        %v418 = vld [vmem:[%s3] sm:$0x1]
        %v420 = vlaneseq
        %v421 = vshrl.u32 %v420, 7
        %v422 = vsub.s32 0, %v421
        %v423 = vrot.slane %v418, %v422
        %v425 = vadd.f32 %v417, %v423
        %426 = vst [vmem:[%s237] sm:$0xff] %v425
      $region44: #{gcn_forward.3} parent=35 // pred_fallthru
        _
      %p427 = scmp.lt.s32.totalorder %s19, 1
      %s428 = scalar_select %p427, %s19, 1
      %s429 = smul.addr %s428, 8
      %s430 = scalar_lea.vmem %s4, %s429
      // Predicated region
      $region45: #{gcn_forward.3} parent=35 // pred_check
        %p431 = pneg %p141
      $region46: #{gcn_forward.3} parent=35 // pred_check_branch
        %433 = sbr.rel (%p431) target = $region48
      $region47: #{gcn_forward.3} parent=35 // pred_region
        _
      $region48: #{gcn_forward.3} parent=35 // pred_fallthru
        _
    $region36: #{gcn_forward.3} parent=5 // pred_fallthru
      _
    %p434 = scmp.le.s32.totalorder 2, %s10
    // Predicated region
    $region49: #{gcn_forward.3} parent=5 // pred_check
      %p435 = pneg %p434
    $region50: #{gcn_forward.3} parent=5 // pred_check_branch
      %437 = sbr.rel (%p435) target = $region52
    $region51: #{gcn_forward.3} parent=5 // pred_region
      %s438 = ssub.s32 %s10, 2
      // Predicated region
      $region53: #{gcn_forward.3} parent=51 // pred_check
        %p439 = pneg %p147
      $region54: #{gcn_forward.3} parent=51 // pred_check_branch
        %441 = sbr.rel (%p439) target = $region56
      $region55: #{gcn_forward.3} parent=51 // pred_region
        %p442 = scmp.lt.s32.totalorder %s21, 1
        %s443 = scalar_select %p442, %s21, 1
        %s444 = smul.addr %s443, 8
        %s445 = scalar_lea.vmem %s4, %s444
      $region56: #{gcn_forward.3} parent=51 // pred_fallthru
        _
    $region52: #{gcn_forward.3} parent=5 // pred_fallthru
      _
  $region6: #{gcn_forward.3} parent=0 // loop_footer
    %s14 = sadd.s32 1, %s10
  $region7: #{gcn_forward.3} parent=0 // loop_footer_branch
    %9 = sbr.rel target = $region3
  $region8: #{gcn_forward.3} parent=0 // loop_exit
    _

</llo_original>
